<compile_context>
chip_gen: v7x
topology: tpu7x:2x2x1
jax: 0.10.0
libtpu: 0.0.40
codegen_flags: <defaults>
</compile_context>

<pallas_src>
import functools
from math import sqrt

import jax
import jax.numpy as jnp
from jax import lax
from jax.experimental import pallas as pl
from jax.experimental.pallas import tpu as pltpu


def _round_up(x, m):
    return ((x + m - 1) // m) * m


def _vmem_budget():
    """(tile working-set budget, scoped vmem limit) in bytes, generation-aware."""
    cap = 64 * 1024 * 1024  # conservative fallback = v7x per-TC VMEM
    try:
        info = pltpu.get_tpu_info()
        cap = int(getattr(info, "vmem_capacity_bytes", cap))
    except Exception:
        pass
    budget = int(cap * 0.70)                          # double-buffered tile working set
    limit = min(int(cap * 0.85), 100 * 1024 * 1024)   # compiler scoped-VMEM limit
    return budget, limit


def _select_tiles(M, N, K, m_align, in_bytes, out_bytes, need_acc, budget,
                  tm_max, tn_max, tk_max):
    """Pick (tm, tn, tk) fitting the VMEM budget with double buffering."""
    tm = min(_round_up(M, m_align), _round_up(tm_max, m_align))
    tn = min(_round_up(N, 128), _round_up(tn_max, 128))
    tk = min(_round_up(K, 128), _round_up(tk_max, 128))

    def footprint(tm, tn, tk):
        buf = 2 * (tm * tk + tk * tn) * in_bytes     # double-buffered x, w
        buf += 2 * tn * 4                            # double-buffered bias (f32)
        buf += 2 * tm * tn * out_bytes               # double-buffered output
        if need_acc:
            buf += tm * tn * 4                       # f32 accumulator scratch
        return buf

    while footprint(tm, tn, tk) > budget:
        if tk > 256:
            tk = _round_up(tk // 2, 128)
        elif tn > 256:
            tn = _round_up(tn // 2, 128)
        elif tm > max(2 * m_align, 64):
            tm = _round_up(tm // 2, m_align)
        else:
            break

    # If the whole problem fits in a single (i, j) tile, split one parallel dim so
    # both TensorCores on v7x get work (an extra ~0.35us grid step on 1-TC chips).
    if _round_up(M, tm) // tm == 1 and _round_up(N, tn) // tn == 1:
        if tm >= 2 * m_align:
            tm = _round_up((tm + 1) // 2, m_align)
        elif tn >= 256:
            tn //= 2
    return tm, tn, tk


def _kernel_f32_out(x_ref, w_ref, b_ref, o_ref, *, scale):
    """f32 output: the output block is resident across K -> accumulate in place."""
    @pl.when(pl.program_id(2) == 0)
    def _():
        o_ref[...] = jnp.zeros_like(o_ref)

    # x (tm, tk) @ w (tk, tn): canonical MXU layout, no transpose anywhere.
    o_ref[...] += lax.dot_general(
        x_ref[...], w_ref[...],
        dimension_numbers=(((1,), (0,)), ((), ())),
        preferred_element_type=jnp.float32,
    )

    @pl.when(pl.program_id(2) == pl.num_programs(2) - 1)
    def _():
        o_ref[...] = o_ref[...] * scale + b_ref[...]


def _kernel_with_acc(x_ref, w_ref, b_ref, o_ref, acc_ref, *, scale):
    """Sub-f32 output: keep an f32 scratch accumulator, cast once at finalize."""
    @pl.when(pl.program_id(2) == 0)
    def _():
        acc_ref[...] = jnp.zeros_like(acc_ref)

    acc_ref[...] += lax.dot_general(
        x_ref[...], w_ref[...],
        dimension_numbers=(((1,), (0,)), ((), ())),
        preferred_element_type=jnp.float32,
    )

    @pl.when(pl.program_id(2) == pl.num_programs(2) - 1)
    def _():
        o_ref[...] = (acc_ref[...] * scale + b_ref[...]).astype(o_ref.dtype)


def equal_linear(x, weight_orig, bias, *, use_bf16_operands=False,
                 tm_max=512, tn_max=512, tk_max=1024):
    """EqualLinear forward: y = x @ (weight_orig * sqrt(2/in_dim)).T + bias."""
    batch, in_dim = x.shape
    out_dim, in_dim_w = weight_orig.shape
    assert in_dim == in_dim_w
    assert bias.shape == (out_dim,)

    scale = sqrt(2.0 / in_dim)  # fan_in == in_dim for nn.Linear

    out_dtype = x.dtype
    op_dtype = (jnp.bfloat16
                if (use_bf16_operands and x.dtype == jnp.float32)
                else x.dtype)
    in_bytes = jnp.dtype(op_dtype).itemsize
    out_bytes = jnp.dtype(out_dtype).itemsize
    # dtype-aware sublane packing for the second-minor (M) dim.
    m_align = {4: 8, 2: 16, 1: 32}.get(in_bytes, 8)

    need_acc = out_dtype != jnp.float32
    budget, vmem_limit = _vmem_budget()
    tm, tn, tk = _select_tiles(batch, out_dim, in_dim, m_align, in_bytes,
                               out_bytes, need_acc, budget,
                               tm_max, tn_max, tk_max)

    Mp = _round_up(batch, tm)
    Np = _round_up(out_dim, tn)
    Kp = _round_up(in_dim, tk)

    # One-time XLA transpose of the parameter to (K, N); zero-padding is exact
    # (padded K contributes 0 to the dot, padded M/N rows are sliced off).
    xp = x.astype(op_dtype)
    wT = weight_orig.T.astype(op_dtype)
    if Mp != batch or Kp != in_dim:
        xp = jnp.pad(xp, ((0, Mp - batch), (0, Kp - in_dim)))
    if Kp != in_dim or Np != out_dim:
        wT = jnp.pad(wT, ((0, Kp - in_dim), (0, Np - out_dim)))
    bp = bias.astype(jnp.float32)
    if Np != out_dim:
        bp = jnp.pad(bp, (0, Np - out_dim))
    bp = bp.reshape(1, Np)

    grid = (Mp // tm, Np // tn, Kp // tk)

    # Advisory cost: padded shapes, counting operand revisits across the grid.
    cost = pl.CostEstimate(
        flops=2 * Mp * Kp * Np,
        transcendentals=0,
        bytes_accessed=int(in_bytes * (Mp * Kp * (Np // tn) + Kp * Np * (Mp // tm))
                           + out_bytes * Mp * Np + 4 * Np),
    )

    in_specs = [
        pl.BlockSpec((tm, tk), lambda i, j, k: (i, k)),   # x tile   (M, K)
        pl.BlockSpec((tk, tn), lambda i, j, k: (k, j)),   # weight tile (K, N)
        pl.BlockSpec((1, tn), lambda i, j, k: (0, j)),    # bias tile
    ]
    out_spec = pl.BlockSpec((tm, tn), lambda i, j, k: (i, j))

    if need_acc:
        kernel = functools.partial(_kernel_with_acc, scale=scale)
        scratch = [pltpu.VMEM((tm, tn), jnp.float32)]
    else:
        kernel = functools.partial(_kernel_f32_out, scale=scale)
        scratch = []

    out_padded = pl.pallas_call(
        kernel,
        out_shape=jax.ShapeDtypeStruct((Mp, Np), out_dtype),
        grid_spec=pltpu.PrefetchScalarGridSpec(
            num_scalar_prefetch=0,
            grid=grid,
            in_specs=in_specs,
            out_specs=out_spec,
            scratch_shapes=scratch,
        ),
        compiler_params=pltpu.CompilerParams(
            dimension_semantics=("parallel", "parallel", "arbitrary"),
            vmem_limit_bytes=vmem_limit,
        ),
        cost_estimate=cost,
    )(xp, wT, bp)

    if Mp == batch and Np == out_dim:
        return out_padded
    return out_padded[:batch, :out_dim]


if __name__ == "__main__":
    key = jax.random.PRNGKey(0)
    k_x, k_w = jax.random.split(key)

    batch, in_dim, out_dim = 8, 32, 16

    # Deterministic parameter init mirroring EqualLinear.__init__:
    #   linear.weight.data.normal_()  -> N(0,1)   (stored as weight_orig)
    #   linear.bias.data.zero_()      -> zeros
    weight_orig = jax.random.normal(k_w, (out_dim, in_dim), dtype=jnp.float32)
    bias = jnp.zeros((out_dim,), dtype=jnp.float32)

    x = jax.random.normal(k_x, (batch, in_dim), dtype=jnp.float32)

    out = equal_linear(x, weight_orig, bias)
    out = jax.block_until_ready(out)

    # Reference check in plain JAX (same math as the PyTorch module).
    scale = sqrt(2.0 / in_dim)
    ref = jnp.dot(x, (weight_orig * scale).T,
                  precision=jax.lax.Precision.HIGHEST) + bias
    assert out.shape == (batch, out_dim)
    assert jnp.allclose(out, ref, atol=1e-4, rtol=1e-4), \
        float(jnp.max(jnp.abs(out - ref)))

    print("KERNEL_OK")
</pallas_src>

<mosaic_0001>
module attributes {stable_mosaic.version = 11 : i64} {
  func.func @_kernel_f32_out(%arg0: i32, %arg1: i32, %arg2: i32, %arg3: memref<8x128xf32, #tpu.memory_space<vmem>>, %arg4: memref<128x128xf32, #tpu.memory_space<vmem>>, %arg5: memref<1x128xf32, #tpu.memory_space<vmem>>, %arg6: memref<8x128xf32, #tpu.memory_space<vmem>>) attributes {dimension_semantics = [#tpu.dimension_semantics<parallel>, #tpu.dimension_semantics<parallel>, #tpu.dimension_semantics<arbitrary>], iteration_bounds = array<i64: 1, 1, 1>, scalar_prefetch = 0 : i64, scratch_operands = 0 : i64, tpu.core_type = #tpu.core_type<tc>, window_params = [{transform_indices = @transform_0, window_bounds = array<i64: 8, 128>}, {transform_indices = @transform_1, window_bounds = array<i64: 128, 128>}, {transform_indices = @transform_2, window_bounds = array<i64: 1, 128>}, {transform_indices = @transform_3, window_bounds = array<i64: 8, 128>}]} {
    %c0_i32 = arith.constant 0 : i32
    %0 = arith.cmpi eq, %arg2, %c0_i32 : i32
    %1 = arith.extui %0 : i1 to i32
    %c0_i32_0 = arith.constant 0 : i32
    %2 = arith.cmpi ne, %1, %c0_i32_0 : i32
    scf.if %2 {
      %cst_10 = arith.constant 0.000000e+00 : f32
      %12 = vector.broadcast %cst_10 : f32 to vector<8x128xf32>
      %c0_11 = arith.constant 0 : index
      %c0_12 = arith.constant 0 : index
      %13 = vector.load %arg6[%c0_11, %c0_12] : memref<8x128xf32, #tpu.memory_space<vmem>>, vector<8x128xf32>
      tpu.vector_store %arg6[%c0_11, %c0_12], %12 {strides = array<i32>} : memref<8x128xf32, #tpu.memory_space<vmem>>, vector<8x128xf32>,
    } else {
    }
    %c0 = arith.constant 0 : index
    %c0_1 = arith.constant 0 : index
    %3 = vector.load %arg6[%c0, %c0_1] : memref<8x128xf32, #tpu.memory_space<vmem>>, vector<8x128xf32>
    %c0_2 = arith.constant 0 : index
    %c0_3 = arith.constant 0 : index
    %4 = vector.load %arg3[%c0_2, %c0_3] : memref<8x128xf32, #tpu.memory_space<vmem>>, vector<8x128xf32>
    %c0_4 = arith.constant 0 : index
    %c0_5 = arith.constant 0 : index
    %5 = vector.load %arg4[%c0_4, %c0_5] : memref<128x128xf32, #tpu.memory_space<vmem>>, vector<128x128xf32>
    %cst = arith.constant dense<0.000000e+00> : vector<8x128xf32>
    %6 = tpu.matmul %4, %5, %cst {dimension_numbers = #tpu.dot_dimension_numbers<[1], [0], [0], [1], [0, 0, 1, 1], [], []>} : vector<8x128xf32>, vector<128x128xf32>, vector<8x128xf32> -> vector<8x128xf32>
    %7 = arith.addf %3, %6 : vector<8x128xf32>
    %c0_6 = arith.constant 0 : index
    %c0_7 = arith.constant 0 : index
    %8 = vector.load %arg6[%c0_6, %c0_7] : memref<8x128xf32, #tpu.memory_space<vmem>>, vector<8x128xf32>
    tpu.vector_store %arg6[%c0_6, %c0_7], %7 {strides = array<i32>} : memref<8x128xf32, #tpu.memory_space<vmem>>, vector<8x128xf32>,
    %c0_i32_8 = arith.constant 0 : i32
    %9 = arith.cmpi eq, %arg2, %c0_i32_8 : i32
    %10 = arith.extui %9 : i1 to i32
    %c0_i32_9 = arith.constant 0 : i32
    %11 = arith.cmpi ne, %10, %c0_i32_9 : i32
    scf.if %11 {
      %c0_10 = arith.constant 0 : index
      %c0_11 = arith.constant 0 : index
      %12 = vector.load %arg6[%c0_10, %c0_11] : memref<8x128xf32, #tpu.memory_space<vmem>>, vector<8x128xf32>
      %cst_12 = arith.constant 2.500000e-01 : f32
      %13 = vector.broadcast %cst_12 : f32 to vector<8x128xf32>
      %14 = arith.mulf %12, %13 : vector<8x128xf32>
      %c0_13 = arith.constant 0 : index
      %c0_14 = arith.constant 0 : index
      %15 = vector.load %arg5[%c0_13, %c0_14] : memref<1x128xf32, #tpu.memory_space<vmem>>, vector<1x128xf32>
      %16 = vector.broadcast %15 : vector<1x128xf32> to vector<8x128xf32>
      %17 = arith.addf %14, %16 : vector<8x128xf32>
      %c0_15 = arith.constant 0 : index
      %c0_16 = arith.constant 0 : index
      %18 = vector.load %arg6[%c0_15, %c0_16] : memref<8x128xf32, #tpu.memory_space<vmem>>, vector<8x128xf32>
      tpu.vector_store %arg6[%c0_15, %c0_16], %17 {strides = array<i32>} : memref<8x128xf32, #tpu.memory_space<vmem>>, vector<8x128xf32>,
    } else {
    }
    return
  }
  func.func @transform_0(%arg0: i32, %arg1: i32, %arg2: i32) -> (i32, i32) {
    %c0_i32 = arith.constant 0 : i32
    return %arg0, %arg2 : i32, i32
  }
  func.func @transform_1(%arg0: i32, %arg1: i32, %arg2: i32) -> (i32, i32) {
    %c0_i32 = arith.constant 0 : i32
    return %arg2, %arg1 : i32, i32
  }
  func.func @transform_2(%arg0: i32, %arg1: i32, %arg2: i32) -> (i32, i32) {
    %c0_i32 = arith.constant 0 : i32
    %c0_i32_0 = arith.constant 0 : i32
    return %c0_i32, %arg1 : i32, i32
  }
  func.func @transform_3(%arg0: i32, %arg1: i32, %arg2: i32) -> (i32, i32) {
    %c0_i32 = arith.constant 0 : i32
    return %arg0, %arg1 : i32, i32
  }
}

</mosaic_0001>

<llo_original>
// kernel: tpu_custom_call.1
$region0: #{tpu_custom_call.1}
  #allocation0 [shape = 'u32[]', space=smem, size = 0x4, offset = 0x4, fixed_abs, tag = 'smem constant byte address 0x4 - core index']
  #allocation1 [shape = 'u32[144,128]{1,0:T(1,128)}', space=vmem, size = 0x12000, scoped, tag = 'internal scratch']
  %s0 = inlined_call_operand.hbm [shape: f32[8,128], index: 0, kind: input, shape index: {}]
  %s1 = inlined_call_operand.hbm [shape: f32[128,128], index: 1, kind: input, shape index: {}]
  %s2 = inlined_call_operand.vmem [shape: f32[1,128], index: 2, kind: input, shape index: {}]
  %s3 = inlined_call_operand.hbm [shape: f32[8,128], index: 3, kind: output, shape index: {}]
  %s4 = sld [smem:[#allocation0]]
  $region38: #{tpu_custom_call.1} parent=0
    _
  %s6 = ssub.s32 1, %s4
  %s7 = scalar_select 0, %s6, %s4
  $region1: #{tpu_custom_call.1} parent=0
    #allocation2 [shape = 'u8[4096]{0}', space=vmem, size = 0x1000, scoped, tag = 'input window, operand 0, single buffered']
    #allocation3 [shape = 's32[1]{0}', space=sflag, size = 0x4, scoped, tag = 'scoped memory for tpu_custom_call.1']
    #allocation4 [shape = 's32[1]{0}', space=sflag, size = 0x4, scoped, tag = 'scoped memory for tpu_custom_call.1']
    #allocation5 [shape = 'u8[65536]{0}', space=vmem, size = 0x10000, scoped, tag = 'input window, operand 1, single buffered']
    #allocation6 [shape = 's32[1]{0}', space=sflag, size = 0x4, scoped, tag = 'scoped memory for tpu_custom_call.1']
    #allocation7 [shape = 'u8[4096]{0}', space=vmem, size = 0x1000, scoped, tag = 'output window, operand 0, single buffered']
    %8 = vsyncpa [#allocation3], 0
    %9 = vsyncpa [#allocation6], 0
    %10 = vsyncpa [#allocation4], 0
    // Predicated region
    $region2: #{tpu_custom_call.1} parent=1 // pred_check
      _
    $region3: #{tpu_custom_call.1} parent=1 // pred_check_branch
      %12 = sbr.rel (0) target = $region5
    $region4: #{tpu_custom_call.1} parent=1 // pred_region
      %s14 = ssub.s32 128, 128
      %15 = vsyncadd [#allocation3], %s14
      %s17 = sshll.u32 [#allocation2], 4
      %s18 = int_to_ptr.vmem [resolvable:$true] %s17
      %20 = dma.hbm_to_vmem [thread:$0]  %s0, 128, %s18, [#allocation3]
    $region5: #{tpu_custom_call.1} parent=1 // pred_fallthru
      _
    // Predicated region
    $region6: #{tpu_custom_call.1} parent=1 // pred_check
      _
    $region7: #{tpu_custom_call.1} parent=1 // pred_check_branch
      %22 = sbr.rel (0) target = $region9
    $region8: #{tpu_custom_call.1} parent=1 // pred_region
      %s24 = ssub.s32 2048, 2048
      %25 = vsyncadd [#allocation6], %s24
      %s26 = sshll.u32 [#allocation5], 4
      %s27 = int_to_ptr.vmem [resolvable:$true] %s26
      %32 = dma.hbm_to_vmem [thread:$0]  %s1, 2048, %s27, [#allocation6], 128, 128, 8
    $region9: #{tpu_custom_call.1} parent=1 // pred_fallthru
      _
    // Predicated region
    $region10: #{tpu_custom_call.1} parent=1 // pred_check
      _
    $region11: #{tpu_custom_call.1} parent=1 // pred_check_branch
      %34 = sbr.rel (0) target = $region13
    $region12: #{tpu_custom_call.1} parent=1 // pred_region
      _
    $region13: #{tpu_custom_call.1} parent=1 // pred_fallthru
      _
    // Predicated region
    $region14: #{tpu_custom_call.1} parent=1 // pred_check
      _
    $region15: #{tpu_custom_call.1} parent=1 // pred_check_branch
      %36 = sbr.rel (0) target = $region17
    $region16: #{tpu_custom_call.1} parent=1 // pred_region
      %37 = dma.done [#allocation3], 128
    $region17: #{tpu_custom_call.1} parent=1 // pred_fallthru
      _
    // Predicated region
    $region18: #{tpu_custom_call.1} parent=1 // pred_check
      _
    $region19: #{tpu_custom_call.1} parent=1 // pred_check_branch
      %39 = sbr.rel (0) target = $region21
    $region20: #{tpu_custom_call.1} parent=1 // pred_region
      %40 = dma.done [#allocation6], 2048
    $region21: #{tpu_custom_call.1} parent=1 // pred_fallthru
      _
    %p41 = scmp.eq.s32.totalorder 0, 0
    // Predicated region
    $region22: #{tpu_custom_call.1} parent=1 // pred_check
      %p42 = pneg %p41
    $region23: #{tpu_custom_call.1} parent=1 // pred_check_branch
      %44 = sbr.rel (%p42) target = $region25
    $region24: #{tpu_custom_call.1} parent=1 // pred_region
      %45 = vst [vmem:[#allocation7] sm:$0xff] 0.0
    $region25: #{tpu_custom_call.1} parent=1 // pred_fallthru
      _
    %v46 = vld [vmem:[#allocation7] sm:$0xff]
    %v47 = vld [vmem:[#allocation2] sm:$0xff]
    %v48 = vld [vmem:[#allocation5] sm:$0xff]
    %v49 = vld [vmem:[#allocation5 + $0x8] sm:$0xff]
    %v50 = vld [vmem:[#allocation5 + $0x10] sm:$0xff]
    %v51 = vld [vmem:[#allocation5 + $0x18] sm:$0xff]
    %v52 = vld [vmem:[#allocation5 + $0x20] sm:$0xff]
    %v53 = vld [vmem:[#allocation5 + $0x28] sm:$0xff]
    %v54 = vld [vmem:[#allocation5 + $0x30] sm:$0xff]
    %v55 = vld [vmem:[#allocation5 + $0x38] sm:$0xff]
    %v56 = vld [vmem:[#allocation5 + $0x40] sm:$0xff]
    %v57 = vld [vmem:[#allocation5 + $0x48] sm:$0xff]
    %v58 = vld [vmem:[#allocation5 + $0x50] sm:$0xff]
    %v59 = vld [vmem:[#allocation5 + $0x58] sm:$0xff]
    %v60 = vld [vmem:[#allocation5 + $0x60] sm:$0xff]
    %v61 = vld [vmem:[#allocation5 + $0x68] sm:$0xff]
    %v62 = vld [vmem:[#allocation5 + $0x70] sm:$0xff]
    %v63 = vld [vmem:[#allocation5 + $0x78] sm:$0xff]
    %64 = vmatprep.subr.mxu0 0.0
    %65 = vmatpush1.msra.mxu0 %v48
    %66 = vmatprep.subr.mxu0 0.0
    %67 = vmatpush1.msra.mxu0 %v49
    %68 = vmatprep.subr.mxu0 0.0
    %69 = vmatpush1.msra.mxu0 %v50
    %70 = vmatprep.subr.mxu0 0.0
    %71 = vmatpush1.msra.mxu0 %v51
    %72 = vmatprep.subr.mxu0 0.0
    %73 = vmatpush1.msra.mxu0 %v52
    %74 = vmatprep.subr.mxu0 0.0
    %75 = vmatpush1.msra.mxu0 %v53
    %76 = vmatprep.subr.mxu0 0.0
    %77 = vmatpush1.msra.mxu0 %v54
    %78 = vmatprep.subr.mxu0 0.0
    %79 = vmatpush1.msra.mxu0 %v55
    %80 = vmatprep.subr.mxu0 0.0
    %81 = vmatpush1.msra.mxu0 %v56
    %82 = vmatprep.subr.mxu0 0.0
    %83 = vmatpush1.msra.mxu0 %v57
    %84 = vmatprep.subr.mxu0 0.0
    %85 = vmatpush1.msra.mxu0 %v58
    %86 = vmatprep.subr.mxu0 0.0
    %87 = vmatpush1.msra.mxu0 %v59
    %88 = vmatprep.subr.mxu0 0.0
    %89 = vmatpush1.msra.mxu0 %v60
    %90 = vmatprep.subr.mxu0 0.0
    %91 = vmatpush1.msra.mxu0 %v61
    %92 = vmatprep.subr.mxu0 0.0
    %93 = vmatpush1.msra.mxu0 %v62
    %94 = vmatprep.subr.mxu0 0.0
    %95 = vmatpush1.msra.mxu0 %v63
    %96 = vmatprep.subr.mxu0 0.0
    %97 = vmatpush1.msra.mxu0 0.0
    %98 = vmatprep.subr.mxu0 0.0
    %99 = vmatpush1.msra.mxu0 0.0
    %100 = vmatprep.subr.mxu0 0.0
    %101 = vmatpush1.msra.mxu0 0.0
    %102 = vmatprep.subr.mxu0 0.0
    %103 = vmatpush1.msra.mxu0 0.0
    %104 = vmatprep.subr.mxu0 0.0
    %105 = vmatpush1.msra.mxu0 0.0
    %106 = vmatprep.subr.mxu0 0.0
    %107 = vmatpush1.msra.mxu0 0.0
    %108 = vmatprep.subr.mxu0 0.0
    %109 = vmatpush1.msra.mxu0 0.0
    %110 = vmatprep.subr.mxu0 0.0
    %111 = vmatpush1.msra.mxu0 0.0
    %112 = vmatprep.subr.mxu0 0.0
    %113 = vmatpush1.msra.mxu0 0.0
    %114 = vmatprep.subr.mxu0 0.0
    %115 = vmatpush1.msra.mxu0 0.0
    %116 = vmatprep.subr.mxu0 0.0
    %117 = vmatpush1.msra.mxu0 0.0
    %118 = vmatprep.subr.mxu0 0.0
    %119 = vmatpush1.msra.mxu0 0.0
    %120 = vmatprep.subr.mxu0 0.0
    %121 = vmatpush1.msra.mxu0 0.0
    %122 = vmatprep.subr.mxu0 0.0
    %123 = vmatpush1.msra.mxu0 0.0
    %124 = vmatprep.subr.mxu0 0.0
    %125 = vmatpush1.msra.mxu0 0.0
    %126 = vmatprep.subr.mxu0 0.0
    %127 = vmatpush1.msra.mxu0 0.0
    %128 = vmatprep.mubr.f32.mxu0 0.0
    %129 = vmatmul.mubr.f32.gmra.mrb[0].mxu0 %v47
    %v130 = vpop.f32.mrb[0].mxu0
    %v131 = vadd.f32 0.0, %v130
    %v132 = vpop.f32.mrb[0].mxu0
    %133 = vdwg.mxu0
    %v134 = vadd.f32 %v46, %v131
    %135 = vst [vmem:[#allocation7] sm:$0xff] %v134
    // Predicated region
    $region26: #{tpu_custom_call.1} parent=1 // pred_check
      %p136 = pneg %p41
    $region27: #{tpu_custom_call.1} parent=1 // pred_check_branch
      %138 = sbr.rel (%p136) target = $region29
    $region28: #{tpu_custom_call.1} parent=1 // pred_region
      %v139 = vld [vmem:[#allocation7] sm:$0xff]
      %v140 = vmul.f32 %v139, 0.25
      %v141 = vld [vmem:[%s2] sm:$0x1]
      %v143 = vlaneseq
      %v144 = vshrl.u32 %v143, 7
      %v145 = vsub.s32 0, %v144
      %v146 = vrot.slane %v141, %v145
      %v148 = vadd.f32 %v140, %v146
      %149 = vst [vmem:[#allocation7] sm:$0xff] %v148
    $region29: #{tpu_custom_call.1} parent=1 // pred_fallthru
      _
    // Predicated region
    $region30: #{tpu_custom_call.1} parent=1 // pred_check
      _
    $region31: #{tpu_custom_call.1} parent=1 // pred_check_branch
      %151 = sbr.rel (0) target = $region33
    $region32: #{tpu_custom_call.1} parent=1 // pred_region
      %s153 = ssub.s32 128, 128
      %154 = vsyncadd [#allocation4], %s153
      %s156 = sshll.u32 [#allocation7], 4
      %s157 = int_to_ptr.vmem [resolvable:$true] %s156
      %159 = dma.vmem_to_hbm [thread:$0]  %s157, 128, %s3, [#allocation4]
    $region33: #{tpu_custom_call.1} parent=1 // pred_fallthru
      _
    // Predicated region
    $region34: #{tpu_custom_call.1} parent=1 // pred_check
      _
    $region35: #{tpu_custom_call.1} parent=1 // pred_check_branch
      %161 = sbr.rel (0) target = $region37
    $region36: #{tpu_custom_call.1} parent=1 // pred_region
      %162 = dma.done [#allocation4], 128
    $region37: #{tpu_custom_call.1} parent=1 // pred_fallthru
      _
    %163 = vsyncpa [#allocation3], 1
    %164 = vsyncpa [#allocation6], 1
    %165 = vsyncpa [#allocation4], 1

</llo_original>
